<compile_context>
chip_gen: v6e
topology: v6e:2x2x1
jax: 0.10.0
libtpu: 0.0.40
codegen_flags: <defaults>
</compile_context>

<pallas_src>
import jax
import jax.numpy as jnp
import numpy as np
from jax import lax
from jax.experimental import pallas as pl
from jax.experimental.pallas import tpu as pltpu

LN_EPS = 1e-5  # torch.nn.LayerNorm default


# ----------------------------- helpers ------------------------------------ #

def _round_up(x, m):
    return ((x + m - 1) // m) * m


def _vmem_capacity_bytes():
    try:
        return int(pltpu.get_tpu_info().vmem_capacity_bytes)
    except Exception:
        return 64 * 2**20  # conservative default (v7x per-TensorCore VMEM)


def _interp_matrix(in_size: int, out_size: int) -> np.ndarray:
    """Linear-interp matrix matching F.interpolate(mode='linear', align_corners=True)."""
    W = np.zeros((in_size, out_size), dtype=np.float32)
    if out_size == 1:
        W[0, 0] = 1.0
        return W
    for j in range(out_size):
        pos = j * (in_size - 1) / (out_size - 1) if in_size > 1 else 0.0
        lo = int(np.floor(pos))
        hi = min(lo + 1, in_size - 1)
        frac = pos - lo
        W[lo, j] += 1.0 - frac
        W[hi, j] += frac
    return W


def _segment_mean_matrix(h: int, k: int) -> jnp.ndarray:
    """(k*h, k*h) block-diagonal matrix of 1/h (exact in bf16: h is a power of 2)."""
    blk = np.full((h, h), 1.0 / h, dtype=np.float32)
    m = np.kron(np.eye(k, dtype=np.float32), blk)
    return jnp.asarray(m, dtype=jnp.bfloat16)


def _split_f32(v):
    """Split an f32 value into bf16 (hi, lo) with hi + lo ~= v to ~2^-17 rel."""
    hi = v.astype(jnp.bfloat16)
    lo = (v - hi.astype(jnp.float32)).astype(jnp.bfloat16)
    return hi, lo


def _acc_dot(a_bf16, b_bf16):
    return jnp.dot(a_bf16, b_bf16, preferred_element_type=jnp.float32)


# ----------------------------- kernel -------------------------------------- #

def _make_addnorm_kernel(packed: bool, resample: bool):
    """Kernel over one (row_tile, W) tile; LayerNorm reduction over the lane axis."""

    def kernel(*refs):
        refs = list(refs)
        x_ref = refs.pop(0)
        skip_ref = refs.pop(0)
        if resample:
            wi_hi_ref = refs.pop(0)
            wi_lo_ref = refs.pop(0)
        gate_ref = refs.pop(0)
        w_ref = refs.pop(0)
        b_ref = refs.pop(0)
        if packed:
            seg_ref = refs.pop(0)
        o_ref = refs.pop(0)

        x = x_ref[...].astype(jnp.float32)
        sk = skip_ref[...].astype(jnp.float32)
        if resample:
            # Fused TimeDistributedInterpolation: skip @ interp on the MXU.
            # bf16 hi/lo split of both operands (lo*lo dropped) -> ~f32 accurate.
            sk_hi, sk_lo = _split_f32(sk)
            sk = (_acc_dot(sk_hi, wi_hi_ref[...])
                  + _acc_dot(sk_hi, wi_lo_ref[...])
                  + _acc_dot(sk_lo, wi_hi_ref[...]))

        s = x + sk * gate_ref[...]

        if packed:
            # Per-original-row mean / centered variance via block-diagonal
            # segment-mean matmuls.  Four single-pass bf16 MXU dots total.
            seg = seg_ref[...]
            s_hi, s_lo = _split_f32(s)
            mean = _acc_dot(s_hi, seg) + _acc_dot(s_lo, seg)
            d = s - mean
            d2 = d * d
            d2_hi, d2_lo = _split_f32(d2)
            var = _acc_dot(d2_hi, seg) + _acc_dot(d2_lo, seg)
        else:
            mean = jnp.mean(s, axis=-1, keepdims=True)
            d = s - mean
            var = jnp.mean(d * d, axis=-1, keepdims=True)

        o_ref[...] = (d * lax.rsqrt(var + LN_EPS) * w_ref[...]
                      + b_ref[...]).astype(o_ref.dtype)

    return kernel


# ----------------------------- wrapper ------------------------------------ #

def add_norm(x, skip, mask, ln_weight, ln_bias, *,
             skip_size=None, trainable_add=True, row_tile=None):
    """x: (B, T, H); skip: (B, T, S). Returns LayerNorm(x + gated skip), (B, T, H)."""
    B, T, H = x.shape
    S = skip.shape[-1]
    if skip_size is not None and skip_size != S:
        raise ValueError("skip_size does not match skip.shape[-1]")
    out_dtype = x.dtype
    resample = (S != H)

    # Gate / LN params hoisted out of the kernel (the grid is a sequential
    # loop per TensorCore; don't recompute sigmoid every step).
    if trainable_add:
        gate = jax.nn.sigmoid(mask.astype(jnp.float32)) * 2.0
    else:
        gate = jnp.ones((H,), dtype=jnp.float32)
    w = ln_weight.astype(jnp.float32)
    b = ln_bias.astype(jnp.float32)

    # Lane-dense packing: k consecutive rows share one 128-lane packed row.
    # Only for power-of-two H < 128, so 1/H is exact in bf16 for the seg matrix.
    k = 128 // H if (H < 128 and 128 % H == 0) else 1
    W = k * H        # packed x / out width
    SW = k * S       # packed skip width

    N = B * T
    x2 = x.reshape(N, H)
    s2 = skip.reshape(N, S)

    # Pad ONLY to a multiple of k (< k rows) so a packed row never mixes valid
    # and garbage lanes.  No padding to a tile multiple: the grid uses cdiv and
    # Pallas masks the partial boundary block.
    n_rows = N
    if k > 1 and N % k:
        pad = k - N % k
        x2 = jnp.pad(x2, ((0, pad), (0, 0)))
        s2 = jnp.pad(s2, ((0, pad), (0, 0)))
        n_rows = N + pad
    n_packed = n_rows // k

    xp = x2.reshape(n_packed, W)       # row-major reshape: free
    sp = s2.reshape(n_packed, SW)
    gate_p = jnp.tile(gate, k)[None, :]
    w_p = jnp.tile(w, k)[None, :]
    b_p = jnp.tile(b, k)[None, :]

    # ---- row-tile sizing: as big as a conservative VMEM budget allows ------
    itemsize = jnp.dtype(out_dtype).itemsize
    sk_itemsize = jnp.dtype(skip.dtype).itemsize
    sub = {1: 32, 2: 16}.get(itemsize, 8)            # sublane packing of dtype
    io_bpr = W * itemsize * 2 + SW * sk_itemsize     # x tile + out tile + skip tile
    tmp_bpr = 6 * W * 4                              # in-kernel f32/bf16 temporaries
    per_row = 2 * io_bpr + tmp_bpr                   # 2x: double-buffered I/O
    vmem = _vmem_capacity_bytes()
    if row_tile is None:
        rt = int(min(0.45 * vmem, 48 * 2**20)) // per_row
        rt = max(sub, min(8192, (rt // sub) * sub))
    else:
        rt = max(sub, _round_up(int(row_tile), sub))
    rt = min(rt, _round_up(n_packed, sub))           # never bigger than the data

    grid = (pl.cdiv(n_packed, rt),)
    row_spec = pl.BlockSpec((rt, W), lambda i: (i, 0))
    skip_spec = pl.BlockSpec((rt, SW), lambda i: (i, 0))
    par_spec = pl.BlockSpec((1, W), lambda i: (0, 0))

    operands = [xp, sp]
    in_specs = [row_spec, skip_spec]
    if resample:
        wi = jnp.asarray(np.kron(np.eye(k, dtype=np.float32), _interp_matrix(S, H)))
        wi_hi = wi.astype(jnp.bfloat16)
        wi_lo = (wi - wi_hi.astype(jnp.float32)).astype(jnp.bfloat16)
        operands += [wi_hi, wi_lo]
        in_specs += [pl.BlockSpec((SW, W), lambda i: (0, 0))] * 2
    operands += [gate_p, w_p, b_p]
    in_specs += [par_spec] * 3
    if k > 1:
        operands.append(_segment_mean_matrix(H, k))
        in_specs.append(pl.BlockSpec((W, W), lambda i: (0, 0)))

    kernel = _make_addnorm_kernel(packed=(k > 1), resample=resample)

    out = pl.pallas_call(
        kernel,
        out_shape=jax.ShapeDtypeStruct((n_packed, W), out_dtype),
        grid_spec=pltpu.PrefetchScalarGridSpec(
            num_scalar_prefetch=0,
            grid=grid,
            in_specs=in_specs,
            out_specs=row_spec,
        ),
        compiler_params=pltpu.CompilerParams(
            dimension_semantics=("parallel",),
            vmem_limit_bytes=int(0.9 * vmem),
        ),
    )(*operands)

    return out.reshape(n_rows, H)[:N].reshape(B, T, H)


# ----------------------------- reference ---------------------------------- #

def _reference(x, skip, mask, w, b):
    """Pure-JAX reference matching the PyTorch AddNorm forward."""
    H = x.shape[-1]
    S = skip.shape[-1]
    skip = skip.astype(jnp.float32)
    if S != H:
        skip = jnp.einsum("bts,sh->bth", skip, jnp.asarray(_interp_matrix(S, H)),
                          precision=lax.Precision.HIGHEST)
    skip = skip * jax.nn.sigmoid(mask.astype(jnp.float32)) * 2.0
    s = x.astype(jnp.float32) + skip
    mean = jnp.mean(s, axis=-1, keepdims=True)
    var = jnp.mean((s - mean) ** 2, axis=-1, keepdims=True)
    return (s - mean) / jnp.sqrt(var + LN_EPS) * w + b


if __name__ == "__main__":
    key = jax.random.PRNGKey(0)
    keys = jax.random.split(key, 16)

    def make_params(kk, H):
        k1, k2, k3 = jax.random.split(kk, 3)
        mask = 0.5 * jax.random.normal(k1, (H,), dtype=jnp.float32)
        ln_w = 1.0 + 0.1 * jax.random.normal(k2, (H,), dtype=jnp.float32)
        ln_b = 0.1 * jax.random.normal(k3, (H,), dtype=jnp.float32)
        return mask, ln_w, ln_b

    def check(x, skip, mask, ln_w, ln_b):
        out = jax.block_until_ready(add_norm(x, skip, mask, ln_w, ln_b))
        ref = _reference(x, skip, mask, ln_w, ln_b)
        np.testing.assert_allclose(np.asarray(out), np.asarray(ref),
                                   rtol=1e-4, atol=1e-4)

    # Case 1: H < 128 -> lane-dense packed path (k = 4).
    B, T, H = 2, 8, 32
    x = jax.random.normal(keys[0], (B, T, H), dtype=jnp.float32)
    skip = jax.random.normal(keys[1], (B, T, H), dtype=jnp.float32)
    check(x, skip, *make_params(keys[2], H))

    # Case 2: H >= 128 -> plain path (XLU row reduction).
    H2 = 256
    x2 = jax.random.normal(keys[3], (B, T, H2), dtype=jnp.float32)
    skip2 = jax.random.normal(keys[4], (B, T, H2), dtype=jnp.float32)
    check(x2, skip2, *make_params(keys[5], H2))

    # Case 3: skip_size != input_size -> fused in-kernel interpolation (packed).
    S3, H3 = 16, 32
    x3 = jax.random.normal(keys[6], (B, T, H3), dtype=jnp.float32)
    skip3 = jax.random.normal(keys[7], (B, T, S3), dtype=jnp.float32)
    check(x3, skip3, *make_params(keys[8], H3))

    # Case 4: N not a multiple of k -> tiny (<k rows) pad + masked boundary block.
    B4, T4, H4 = 3, 5, 64
    x4 = jax.random.normal(keys[9], (B4, T4, H4), dtype=jnp.float32)
    skip4 = jax.random.normal(keys[10], (B4, T4, H4), dtype=jnp.float32)
    check(x4, skip4, *make_params(keys[11], H4))

    print("KERNEL_OK")
</pallas_src>

<mosaic_0001>
module attributes {stable_mosaic.version = 11 : i64} {
  func.func @kernel(%arg0: i32, %arg1: memref<8x128xf32, #tpu.memory_space<vmem>>, %arg2: memref<8x128xf32, #tpu.memory_space<vmem>>, %arg3: memref<1x128xf32, #tpu.memory_space<vmem>>, %arg4: memref<1x128xf32, #tpu.memory_space<vmem>>, %arg5: memref<1x128xf32, #tpu.memory_space<vmem>>, %arg6: memref<128x128xbf16, #tpu.memory_space<vmem>>, %arg7: memref<8x128xf32, #tpu.memory_space<vmem>>) attributes {dimension_semantics = [#tpu.dimension_semantics<parallel>], iteration_bounds = array<i64: 1>, scalar_prefetch = 0 : i64, scratch_operands = 0 : i64, tpu.core_type = #tpu.core_type<tc>, window_params = [{transform_indices = @transform_0, window_bounds = array<i64: 8, 128>}, {transform_indices = @transform_1, window_bounds = array<i64: 8, 128>}, {pipeline_mode = #tpu.pipeline_mode<synchronous>, transform_indices = @transform_2, window_bounds = array<i64: 1, 128>}, {pipeline_mode = #tpu.pipeline_mode<synchronous>, transform_indices = @transform_3, window_bounds = array<i64: 1, 128>}, {pipeline_mode = #tpu.pipeline_mode<synchronous>, transform_indices = @transform_4, window_bounds = array<i64: 1, 128>}, {pipeline_mode = #tpu.pipeline_mode<synchronous>, transform_indices = @transform_5, window_bounds = array<i64: 128, 128>}, {transform_indices = @transform_6, window_bounds = array<i64: 8, 128>}]} {
    %c0 = arith.constant 0 : index
    %c0_0 = arith.constant 0 : index
    %0 = vector.load %arg1[%c0, %c0_0] : memref<8x128xf32, #tpu.memory_space<vmem>>, vector<8x128xf32>
    %c0_1 = arith.constant 0 : index
    %c0_2 = arith.constant 0 : index
    %1 = vector.load %arg2[%c0_1, %c0_2] : memref<8x128xf32, #tpu.memory_space<vmem>>, vector<8x128xf32>
    %c0_3 = arith.constant 0 : index
    %c0_4 = arith.constant 0 : index
    %2 = vector.load %arg3[%c0_3, %c0_4] : memref<1x128xf32, #tpu.memory_space<vmem>>, vector<1x128xf32>
    %3 = vector.broadcast %2 : vector<1x128xf32> to vector<8x128xf32>
    %4 = arith.mulf %1, %3 : vector<8x128xf32>
    %5 = arith.addf %0, %4 : vector<8x128xf32>
    %c0_5 = arith.constant 0 : index
    %c0_6 = arith.constant 0 : index
    %6 = vector.load %arg6[%c0_5, %c0_6] : memref<128x128xbf16, #tpu.memory_space<vmem>>, vector<128x128xbf16>
    %7 = arith.truncf %5 : vector<8x128xf32> to vector<8x128xbf16>
    %8 = arith.extf %7 : vector<8x128xbf16> to vector<8x128xf32>
    %9 = arith.subf %5, %8 : vector<8x128xf32>
    %10 = arith.truncf %9 : vector<8x128xf32> to vector<8x128xbf16>
    %cst = arith.constant dense<0.000000e+00> : vector<8x128xf32>
    %11 = tpu.matmul %7, %6, %cst {dimension_numbers = #tpu.dot_dimension_numbers<[1], [0], [0], [1], [0, 0, 1, 1], [], []>} : vector<8x128xbf16>, vector<128x128xbf16>, vector<8x128xf32> -> vector<8x128xf32>
    %cst_7 = arith.constant dense<0.000000e+00> : vector<8x128xf32>
    %12 = tpu.matmul %10, %6, %cst_7 {dimension_numbers = #tpu.dot_dimension_numbers<[1], [0], [0], [1], [0, 0, 1, 1], [], []>} : vector<8x128xbf16>, vector<128x128xbf16>, vector<8x128xf32> -> vector<8x128xf32>
    %13 = arith.addf %11, %12 : vector<8x128xf32>
    %14 = arith.subf %5, %13 : vector<8x128xf32>
    %15 = arith.mulf %14, %14 : vector<8x128xf32>
    %16 = arith.truncf %15 : vector<8x128xf32> to vector<8x128xbf16>
    %17 = arith.extf %16 : vector<8x128xbf16> to vector<8x128xf32>
    %18 = arith.subf %15, %17 : vector<8x128xf32>
    %19 = arith.truncf %18 : vector<8x128xf32> to vector<8x128xbf16>
    %cst_8 = arith.constant dense<0.000000e+00> : vector<8x128xf32>
    %20 = tpu.matmul %16, %6, %cst_8 {dimension_numbers = #tpu.dot_dimension_numbers<[1], [0], [0], [1], [0, 0, 1, 1], [], []>} : vector<8x128xbf16>, vector<128x128xbf16>, vector<8x128xf32> -> vector<8x128xf32>
    %cst_9 = arith.constant dense<0.000000e+00> : vector<8x128xf32>
    %21 = tpu.matmul %19, %6, %cst_9 {dimension_numbers = #tpu.dot_dimension_numbers<[1], [0], [0], [1], [0, 0, 1, 1], [], []>} : vector<8x128xbf16>, vector<128x128xbf16>, vector<8x128xf32> -> vector<8x128xf32>
    %22 = arith.addf %20, %21 : vector<8x128xf32>
    %cst_10 = arith.constant 9.99999974E-6 : f32
    %23 = vector.broadcast %cst_10 : f32 to vector<8x128xf32>
    %24 = arith.addf %22, %23 : vector<8x128xf32>
    %25 = math.rsqrt %24 : vector<8x128xf32>
    %26 = arith.mulf %14, %25 : vector<8x128xf32>
    %c0_11 = arith.constant 0 : index
    %c0_12 = arith.constant 0 : index
    %27 = vector.load %arg4[%c0_11, %c0_12] : memref<1x128xf32, #tpu.memory_space<vmem>>, vector<1x128xf32>
    %28 = vector.broadcast %27 : vector<1x128xf32> to vector<8x128xf32>
    %29 = arith.mulf %26, %28 : vector<8x128xf32>
    %c0_13 = arith.constant 0 : index
    %c0_14 = arith.constant 0 : index
    %30 = vector.load %arg5[%c0_13, %c0_14] : memref<1x128xf32, #tpu.memory_space<vmem>>, vector<1x128xf32>
    %31 = vector.broadcast %30 : vector<1x128xf32> to vector<8x128xf32>
    %32 = arith.addf %29, %31 : vector<8x128xf32>
    %c0_15 = arith.constant 0 : index
    %c0_16 = arith.constant 0 : index
    %33 = vector.load %arg7[%c0_15, %c0_16] : memref<8x128xf32, #tpu.memory_space<vmem>>, vector<8x128xf32>
    tpu.vector_store %arg7[%c0_15, %c0_16], %32 {strides = array<i32>} : memref<8x128xf32, #tpu.memory_space<vmem>>, vector<8x128xf32>,
    return
  }
  func.func @transform_0(%arg0: i32) -> (i32, i32) {
    %c0_i32 = arith.constant 0 : i32
    %c0_i32_0 = arith.constant 0 : i32
    return %arg0, %c0_i32 : i32, i32
  }
  func.func @transform_1(%arg0: i32) -> (i32, i32) {
    %c0_i32 = arith.constant 0 : i32
    %c0_i32_0 = arith.constant 0 : i32
    return %arg0, %c0_i32 : i32, i32
  }
  func.func @transform_2(%arg0: i32) -> (i32, i32) {
    %c0_i32 = arith.constant 0 : i32
    %c0_i32_0 = arith.constant 0 : i32
    %c0_i32_1 = arith.constant 0 : i32
    return %c0_i32, %c0_i32_0 : i32, i32
  }
  func.func @transform_3(%arg0: i32) -> (i32, i32) {
    %c0_i32 = arith.constant 0 : i32
    %c0_i32_0 = arith.constant 0 : i32
    %c0_i32_1 = arith.constant 0 : i32
    return %c0_i32, %c0_i32_0 : i32, i32
  }
  func.func @transform_4(%arg0: i32) -> (i32, i32) {
    %c0_i32 = arith.constant 0 : i32
    %c0_i32_0 = arith.constant 0 : i32
    %c0_i32_1 = arith.constant 0 : i32
    return %c0_i32, %c0_i32_0 : i32, i32
  }
  func.func @transform_5(%arg0: i32) -> (i32, i32) {
    %c0_i32 = arith.constant 0 : i32
    %c0_i32_0 = arith.constant 0 : i32
    %c0_i32_1 = arith.constant 0 : i32
    return %c0_i32, %c0_i32_0 : i32, i32
  }
  func.func @transform_6(%arg0: i32) -> (i32, i32) {
    %c0_i32 = arith.constant 0 : i32
    %c0_i32_0 = arith.constant 0 : i32
    return %arg0, %c0_i32 : i32, i32
  }
}

</mosaic_0001>

<llo_original>
// kernel: tpu_custom_call.1
$region0: #{tpu_custom_call.1}
  #allocation0 [shape = 'u32[]', space=smem, size = 0x4, offset = 0x4, fixed_abs, tag = 'smem constant byte address 0x4 - core index']
  #allocation1 [shape = 'u32[144,128]{1,0:T(1,128)}', space=vmem, size = 0x12000, scoped, tag = 'internal scratch']
  %s0 = inlined_call_operand.hbm [shape: f32[4,128], index: 0, kind: input, shape index: {}]
  %s1 = inlined_call_operand.hbm [shape: f32[4,128], index: 1, kind: input, shape index: {}]
  %s2 = inlined_call_operand.vmem [shape: f32[1,128], index: 2, kind: input, shape index: {}]
  %s3 = inlined_call_operand.vmem [shape: f32[1,128], index: 3, kind: input, shape index: {}]
  %s4 = inlined_call_operand.vmem [shape: f32[1,128], index: 4, kind: input, shape index: {}]
  %s5 = inlined_call_operand.hbm [shape: bf16[128,128], index: 5, kind: input, shape index: {}]
  %s6 = inlined_call_operand.hbm [shape: f32[4,128], index: 6, kind: output, shape index: {}]
  %s7 = sld [smem:[#allocation0]]
  $region46: #{tpu_custom_call.1} parent=0
    _
  %s9 = ssub.s32 1, %s7
  %s10 = scalar_select 0, %s9, %s7
  $region1: #{tpu_custom_call.1} parent=0
    #allocation2 [shape = 'u8[4096]{0}', space=vmem, size = 0x1000, scoped, tag = 'input window, operand 0, single buffered']
    #allocation3 [shape = 's32[1]{0}', space=sflag, size = 0x4, scoped, tag = 'scoped memory for tpu_custom_call.1']
    #allocation4 [shape = 's32[1]{0}', space=sflag, size = 0x4, scoped, tag = 'scoped memory for tpu_custom_call.1']
    #allocation5 [shape = 'u8[4096]{0}', space=vmem, size = 0x1000, scoped, tag = 'input window, operand 1, single buffered']
    #allocation6 [shape = 's32[1]{0}', space=sflag, size = 0x4, scoped, tag = 'scoped memory for tpu_custom_call.1']
    #allocation7 [shape = 'u8[32768]{0}', space=vmem, size = 0x8000, scoped, tag = 'input window, operand 5, single buffered']
    #allocation8 [shape = 'u8[4096]{0}', space=vmem, size = 0x1000, scoped, tag = 'output window, operand 0, single buffered']
    %11 = vsyncpa [#allocation3], 0
    %12 = vsyncpa [#allocation6], 0
    %13 = vsyncpa [#allocation4], 0
    // Predicated region
    $region2: #{tpu_custom_call.1} parent=1 // pred_check
      _
    $region3: #{tpu_custom_call.1} parent=1 // pred_check_branch
      %15 = sbr.rel (0) target = $region5
    $region4: #{tpu_custom_call.1} parent=1 // pred_region
      %s17 = ssub.s32 128, 64
      %18 = vsyncadd [#allocation3], %s17
      %s19 = sshll.u32 [#allocation2], 4
      %s20 = int_to_ptr.vmem [resolvable:$true] %s19
      %25 = dma.hbm_to_vmem [thread:$0]  %s0, 64, %s20, [#allocation3], 64, 64, 4
    $region5: #{tpu_custom_call.1} parent=1 // pred_fallthru
      _
    // Predicated region
    $region6: #{tpu_custom_call.1} parent=1 // pred_check
      _
    $region7: #{tpu_custom_call.1} parent=1 // pred_check_branch
      %27 = sbr.rel (0) target = $region9
    $region8: #{tpu_custom_call.1} parent=1 // pred_region
      %s29 = ssub.s32 128, 64
      %30 = vsyncadd [#allocation6], %s29
      %s31 = sshll.u32 [#allocation5], 4
      %s32 = int_to_ptr.vmem [resolvable:$true] %s31
      %37 = dma.hbm_to_vmem [thread:$0]  %s1, 64, %s32, [#allocation6], 64, 64, 4
    $region9: #{tpu_custom_call.1} parent=1 // pred_fallthru
      _
    // Predicated region
    $region10: #{tpu_custom_call.1} parent=1 // pred_check
      _
    $region11: #{tpu_custom_call.1} parent=1 // pred_check_branch
      %39 = sbr.rel (0) target = $region13
    $region12: #{tpu_custom_call.1} parent=1 // pred_region
      _
    $region13: #{tpu_custom_call.1} parent=1 // pred_fallthru
      _
    // Predicated region
    $region14: #{tpu_custom_call.1} parent=1 // pred_check
      _
    $region15: #{tpu_custom_call.1} parent=1 // pred_check_branch
      %41 = sbr.rel (0) target = $region17
    $region16: #{tpu_custom_call.1} parent=1 // pred_region
      _
    $region17: #{tpu_custom_call.1} parent=1 // pred_fallthru
      _
    // Predicated region
    $region18: #{tpu_custom_call.1} parent=1 // pred_check
      _
    $region19: #{tpu_custom_call.1} parent=1 // pred_check_branch
      %43 = sbr.rel (0) target = $region21
    $region20: #{tpu_custom_call.1} parent=1 // pred_region
      _
    $region21: #{tpu_custom_call.1} parent=1 // pred_fallthru
      _
    // Predicated region
    $region22: #{tpu_custom_call.1} parent=1 // pred_check
      _
    $region23: #{tpu_custom_call.1} parent=1 // pred_check_branch
      %45 = sbr.rel (0) target = $region25
    $region24: #{tpu_custom_call.1} parent=1 // pred_region
      %s47 = ssub.s32 1024, 1024
      %48 = vsyncadd [#allocation6], %s47
      %s49 = sshll.u32 [#allocation7], 4
      %s50 = int_to_ptr.vmem [resolvable:$true] %s49
      %55 = dma.hbm_to_vmem [thread:$0]  %s5, 1024, %s50, [#allocation6], 64, 64, 4
    $region25: #{tpu_custom_call.1} parent=1 // pred_fallthru
      _
    // Predicated region
    $region26: #{tpu_custom_call.1} parent=1 // pred_check
      _
    $region27: #{tpu_custom_call.1} parent=1 // pred_check_branch
      %57 = sbr.rel (0) target = $region29
    $region28: #{tpu_custom_call.1} parent=1 // pred_region
      %58 = dma.done [#allocation3], 128
    $region29: #{tpu_custom_call.1} parent=1 // pred_fallthru
      _
    // Predicated region
    $region30: #{tpu_custom_call.1} parent=1 // pred_check
      _
    $region31: #{tpu_custom_call.1} parent=1 // pred_check_branch
      %60 = sbr.rel (0) target = $region33
    $region32: #{tpu_custom_call.1} parent=1 // pred_region
      %61 = dma.done [#allocation6], 128
    $region33: #{tpu_custom_call.1} parent=1 // pred_fallthru
      _
    // Predicated region
    $region34: #{tpu_custom_call.1} parent=1 // pred_check
      _
    $region35: #{tpu_custom_call.1} parent=1 // pred_check_branch
      %63 = sbr.rel (0) target = $region37
    $region36: #{tpu_custom_call.1} parent=1 // pred_region
      %64 = dma.done [#allocation6], 1024
    $region37: #{tpu_custom_call.1} parent=1 // pred_fallthru
      _
    %v66 = vld [vmem:[#allocation2] sm:$0xff]
    %v67 = vld [vmem:[#allocation5] sm:$0xff]
    %v68 = vld [vmem:[%s2] sm:$0x1]
    %v70 = vlaneseq
    %v71 = vshrl.u32 %v70, 7
    %v72 = vsub.s32 0, %v71
    %v73 = vrot.slane %v68, %v72
    %v75 = vmul.f32 %v67, %v73
    %v76 = vadd.f32 %v66, %v75
    %v77 = vld [vmem:[#allocation7] sm:$0xf]
    %v78 = vld [vmem:[#allocation7 + $0x4] sm:$0xf]
    %v79 = vld [vmem:[#allocation7 + $0x8] sm:$0xf]
    %v80 = vld [vmem:[#allocation7 + $0xc] sm:$0xf]
    %v81 = vld [vmem:[#allocation7 + $0x10] sm:$0xf]
    %v82 = vld [vmem:[#allocation7 + $0x14] sm:$0xf]
    %v83 = vld [vmem:[#allocation7 + $0x18] sm:$0xf]
    %v84 = vld [vmem:[#allocation7 + $0x1c] sm:$0xf]
    %v85 = vld [vmem:[#allocation7 + $0x20] sm:$0xf]
    %v86 = vld [vmem:[#allocation7 + $0x24] sm:$0xf]
    %v87 = vld [vmem:[#allocation7 + $0x28] sm:$0xf]
    %v88 = vld [vmem:[#allocation7 + $0x2c] sm:$0xf]
    %v89 = vld [vmem:[#allocation7 + $0x30] sm:$0xf]
    %v90 = vld [vmem:[#allocation7 + $0x34] sm:$0xf]
    %v91 = vld [vmem:[#allocation7 + $0x38] sm:$0xf]
    %v92 = vld [vmem:[#allocation7 + $0x3c] sm:$0xf]
    %v93 = vpack.c.bf16 %v76, %v76
    %v94 = vunpack.c.l.bf16 %v93
    %v95 = vsub.f32 %v76, %v94
    %v96 = vpack.c.bf16 %v95, %v95
    %v113 = vunpack.c.l.b16 %v77
    %v114 = vunpack.c.l.b16 %v78
    %v115 = vunpack.c.l.b16 %v79
    %v116 = vunpack.c.l.b16 %v80
    %v117 = vunpack.c.l.b16 %v81
    %v118 = vunpack.c.l.b16 %v82
    %v119 = vunpack.c.l.b16 %v83
    %v120 = vunpack.c.l.b16 %v84
    %v121 = vunpack.c.l.b16 %v85
    %v122 = vunpack.c.l.b16 %v86
    %v123 = vunpack.c.l.b16 %v87
    %v124 = vunpack.c.l.b16 %v88
    %v125 = vunpack.c.l.b16 %v89
    %v126 = vunpack.c.l.b16 %v90
    %v127 = vunpack.c.l.b16 %v91
    %v128 = vunpack.c.l.b16 %v92
    %v129 = vpack.c.b16 %v114, %v113
    %v130 = vpack.c.b16 %v116, %v115
    %v131 = vpack.c.b16 %v118, %v117
    %v132 = vpack.c.b16 %v120, %v119
    %v133 = vpack.c.b16 %v122, %v121
    %v134 = vpack.c.b16 %v124, %v123
    %v135 = vpack.c.b16 %v126, %v125
    %v136 = vpack.c.b16 %v128, %v127
    %145 = vmatprep.subr.bf16.mxu0 0
    %146 = vmatpush1.bf16.msra.mxu0 %v136
    %147 = vmatprep.subr.bf16.mxu0 0
    %148 = vmatpush1.bf16.msra.mxu0 %v135
    %149 = vmatprep.subr.bf16.mxu0 0
    %150 = vmatpush1.bf16.msra.mxu0 %v134
    %151 = vmatprep.subr.bf16.mxu0 0
    %152 = vmatpush1.bf16.msra.mxu0 %v133
    %153 = vmatprep.subr.bf16.mxu0 0
    %154 = vmatpush1.bf16.msra.mxu0 %v132
    %155 = vmatprep.subr.bf16.mxu0 0
    %156 = vmatpush1.bf16.msra.mxu0 %v131
    %157 = vmatprep.subr.bf16.mxu0 0
    %158 = vmatpush1.bf16.msra.mxu0 %v130
    %159 = vmatprep.subr.bf16.mxu0 0
    %160 = vmatpush1.bf16.msra.mxu0 %v129
    %161 = vmatprep.subr.bf16.mxu0 0
    %162 = vmatpush2.bf16.msra.mxu0 0
    %163 = vmatprep.subr.bf16.mxu0 0
    %164 = vmatpush2.bf16.msra.mxu0 0
    %165 = vmatprep.subr.bf16.mxu0 0
    %166 = vmatpush2.bf16.msra.mxu0 0
    %167 = vmatprep.subr.bf16.mxu0 0
    %168 = vmatpush2.bf16.msra.mxu0 0
    %169 = vmatprep.subr.bf16.mxu0 0
    %170 = vmatpush2.bf16.msra.mxu0 0
    %171 = vmatprep.subr.bf16.mxu0 0
    %172 = vmatpush2.bf16.msra.mxu0 0
    %173 = vmatprep.subr.bf16.mxu0 0
    %174 = vmatpush2.bf16.msra.mxu0 0
    %175 = vmatprep.subr.bf16.mxu0 0
    %176 = vmatpush2.bf16.msra.mxu0 0
    %177 = vmatprep.mubr.bf16.mxu0 0
    %178 = vmatmul.mubr.bf16.gmra.mxu0 %v96
    %v179 = vpop.f32.mrf.mxu0
    %v180 = vadd.f32 0.0, %v179
    %v181 = vpop.f32.mrf.mxu0
    %v182 = vpop.f32.mrf.mxu0
    %v183 = vpop.f32.mrf.mxu0
    %184 = vdwg.mxu0
    %185 = vmatprep.subr.bf16.mxu0 0
    %186 = vmatpush1.bf16.msra.mxu0 %v136
    %187 = vmatprep.subr.bf16.mxu0 0
    %188 = vmatpush1.bf16.msra.mxu0 %v135
    %189 = vmatprep.subr.bf16.mxu0 0
    %190 = vmatpush1.bf16.msra.mxu0 %v134
    %191 = vmatprep.subr.bf16.mxu0 0
    %192 = vmatpush1.bf16.msra.mxu0 %v133
    %193 = vmatprep.subr.bf16.mxu0 0
    %194 = vmatpush1.bf16.msra.mxu0 %v132
    %195 = vmatprep.subr.bf16.mxu0 0
    %196 = vmatpush1.bf16.msra.mxu0 %v131
    %197 = vmatprep.subr.bf16.mxu0 0
    %198 = vmatpush1.bf16.msra.mxu0 %v130
    %199 = vmatprep.subr.bf16.mxu0 0
    %200 = vmatpush1.bf16.msra.mxu0 %v129
    %201 = vmatprep.subr.bf16.mxu0 0
    %202 = vmatpush2.bf16.msra.mxu0 0
    %203 = vmatprep.subr.bf16.mxu0 0
    %204 = vmatpush2.bf16.msra.mxu0 0
    %205 = vmatprep.subr.bf16.mxu0 0
    %206 = vmatpush2.bf16.msra.mxu0 0
    %207 = vmatprep.subr.bf16.mxu0 0
    %208 = vmatpush2.bf16.msra.mxu0 0
    %209 = vmatprep.subr.bf16.mxu0 0
    %210 = vmatpush2.bf16.msra.mxu0 0
    %211 = vmatprep.subr.bf16.mxu0 0
    %212 = vmatpush2.bf16.msra.mxu0 0
    %213 = vmatprep.subr.bf16.mxu0 0
    %214 = vmatpush2.bf16.msra.mxu0 0
    %215 = vmatprep.subr.bf16.mxu0 0
    %216 = vmatpush2.bf16.msra.mxu0 0
    %217 = vmatprep.mubr.bf16.mxu0 0
    %218 = vmatmul.mubr.bf16.gmra.mxu0 %v93
    %v219 = vpop.f32.mrf.mxu0
    %v220 = vadd.f32 %v180, %v219
    %v221 = vpop.f32.mrf.mxu0
    %v222 = vpop.f32.mrf.mxu0
    %v223 = vpop.f32.mrf.mxu0
    %224 = vdwg.mxu0
    %v225 = vsub.f32 %v76, %v220
    %v226 = vmul.f32 %v225, %v225
    %v227 = vpack.c.bf16 %v226, %v226
    %v228 = vunpack.c.l.bf16 %v227
    %v229 = vsub.f32 %v226, %v228
    %v230 = vpack.c.bf16 %v229, %v229
    %231 = vmatprep.subr.bf16.mxu0 0
    %232 = vmatpush1.bf16.msra.mxu0 %v136
    %233 = vmatprep.subr.bf16.mxu0 0
    %234 = vmatpush1.bf16.msra.mxu0 %v135
    %235 = vmatprep.subr.bf16.mxu0 0
    %236 = vmatpush1.bf16.msra.mxu0 %v134
    %237 = vmatprep.subr.bf16.mxu0 0
    %238 = vmatpush1.bf16.msra.mxu0 %v133
    %239 = vmatprep.subr.bf16.mxu0 0
    %240 = vmatpush1.bf16.msra.mxu0 %v132
    %241 = vmatprep.subr.bf16.mxu0 0
    %242 = vmatpush1.bf16.msra.mxu0 %v131
    %243 = vmatprep.subr.bf16.mxu0 0
    %244 = vmatpush1.bf16.msra.mxu0 %v130
    %245 = vmatprep.subr.bf16.mxu0 0
    %246 = vmatpush1.bf16.msra.mxu0 %v129
    %247 = vmatprep.subr.bf16.mxu0 0
    %248 = vmatpush2.bf16.msra.mxu0 0
    %249 = vmatprep.subr.bf16.mxu0 0
    %250 = vmatpush2.bf16.msra.mxu0 0
    %251 = vmatprep.subr.bf16.mxu0 0
    %252 = vmatpush2.bf16.msra.mxu0 0
    %253 = vmatprep.subr.bf16.mxu0 0
    %254 = vmatpush2.bf16.msra.mxu0 0
    %255 = vmatprep.subr.bf16.mxu0 0
    %256 = vmatpush2.bf16.msra.mxu0 0
    %257 = vmatprep.subr.bf16.mxu0 0
    %258 = vmatpush2.bf16.msra.mxu0 0
    %259 = vmatprep.subr.bf16.mxu0 0
    %260 = vmatpush2.bf16.msra.mxu0 0
    %261 = vmatprep.subr.bf16.mxu0 0
    %262 = vmatpush2.bf16.msra.mxu0 0
    %263 = vmatprep.mubr.bf16.mxu0 0
    %264 = vmatmul.mubr.bf16.gmra.mxu0 %v230
    %v265 = vpop.f32.mrf.mxu0
    %v266 = vadd.f32 0.0, %v265
    %v267 = vpop.f32.mrf.mxu0
    %v268 = vpop.f32.mrf.mxu0
    %v269 = vpop.f32.mrf.mxu0
    %270 = vdwg.mxu0
    %271 = vmatprep.subr.bf16.mxu0 0
    %272 = vmatpush1.bf16.msra.mxu0 %v136
    %273 = vmatprep.subr.bf16.mxu0 0
    %274 = vmatpush1.bf16.msra.mxu0 %v135
    %275 = vmatprep.subr.bf16.mxu0 0
    %276 = vmatpush1.bf16.msra.mxu0 %v134
    %277 = vmatprep.subr.bf16.mxu0 0
    %278 = vmatpush1.bf16.msra.mxu0 %v133
    %279 = vmatprep.subr.bf16.mxu0 0
    %280 = vmatpush1.bf16.msra.mxu0 %v132
    %281 = vmatprep.subr.bf16.mxu0 0
    %282 = vmatpush1.bf16.msra.mxu0 %v131
    %283 = vmatprep.subr.bf16.mxu0 0
    %284 = vmatpush1.bf16.msra.mxu0 %v130
    %285 = vmatprep.subr.bf16.mxu0 0
    %286 = vmatpush1.bf16.msra.mxu0 %v129
    %287 = vmatprep.subr.bf16.mxu0 0
    %288 = vmatpush2.bf16.msra.mxu0 0
    %289 = vmatprep.subr.bf16.mxu0 0
    %290 = vmatpush2.bf16.msra.mxu0 0
    %291 = vmatprep.subr.bf16.mxu0 0
    %292 = vmatpush2.bf16.msra.mxu0 0
    %293 = vmatprep.subr.bf16.mxu0 0
    %294 = vmatpush2.bf16.msra.mxu0 0
    %295 = vmatprep.subr.bf16.mxu0 0
    %296 = vmatpush2.bf16.msra.mxu0 0
    %297 = vmatprep.subr.bf16.mxu0 0
    %298 = vmatpush2.bf16.msra.mxu0 0
    %299 = vmatprep.subr.bf16.mxu0 0
    %300 = vmatpush2.bf16.msra.mxu0 0
    %301 = vmatprep.subr.bf16.mxu0 0
    %302 = vmatpush2.bf16.msra.mxu0 0
    %303 = vmatprep.mubr.bf16.mxu0 0
    %304 = vmatmul.mubr.bf16.gmra.mxu0 %v227
    %v305 = vpop.f32.mrf.mxu0
    %v306 = vadd.f32 %v266, %v305
    %v307 = vpop.f32.mrf.mxu0
    %v308 = vpop.f32.mrf.mxu0
    %v309 = vpop.f32.mrf.mxu0
    %310 = vdwg.mxu0
    %v311 = vadd.f32 %v306, 1e-05
    %v312 = vrsqrt.pop %v311
    %v313 = vmul.f32 %v225, %v312
    %v314 = vld [vmem:[%s3] sm:$0x1]
    %v316 = vlaneseq
    %v317 = vshrl.u32 %v316, 7
    %v318 = vsub.s32 0, %v317
    %v319 = vrot.slane %v314, %v318
    %v321 = vmul.f32 %v313, %v319
    %v322 = vld [vmem:[%s4] sm:$0x1]
    %v324 = vlaneseq
    %v325 = vshrl.u32 %v324, 7
    %v326 = vsub.s32 0, %v325
    %v327 = vrot.slane %v322, %v326
    %v329 = vadd.f32 %v321, %v327
    %330 = vst [vmem:[#allocation8] sm:$0xff] %v329
    // Predicated region
    $region38: #{tpu_custom_call.1} parent=1 // pred_check
      _
    $region39: #{tpu_custom_call.1} parent=1 // pred_check_branch
      %332 = sbr.rel (0) target = $region41
    $region40: #{tpu_custom_call.1} parent=1 // pred_region
      %s334 = ssub.s32 128, 64
      %335 = vsyncadd [#allocation4], %s334
      %s336 = sshll.u32 [#allocation8], 4
      %s337 = int_to_ptr.vmem [resolvable:$true] %s336
      %342 = dma.vmem_to_hbm [thread:$0]  %s337, 64, %s6, [#allocation4], 64, 64, 4
    $region41: #{tpu_custom_call.1} parent=1 // pred_fallthru
      _
    // Predicated region
    $region42: #{tpu_custom_call.1} parent=1 // pred_check
      _
    $region43: #{tpu_custom_call.1} parent=1 // pred_check_branch
      %344 = sbr.rel (0) target = $region45
    $region44: #{tpu_custom_call.1} parent=1 // pred_region
      %345 = dma.done [#allocation4], 128
    $region45: #{tpu_custom_call.1} parent=1 // pred_fallthru
      _
    %346 = vsyncpa [#allocation3], 1
    %347 = vsyncpa [#allocation6], 1
    %348 = vsyncpa [#allocation4], 1

</llo_original>
